<compile_context>
chip_gen: v7x
topology: tpu7x:2x2x1
jax: 0.10.0
libtpu: 0.0.40
codegen_flags: <defaults>
</compile_context>

<pallas_src>
import functools
import math

import jax
import jax.numpy as jnp
from jax.experimental import pallas as pl
from jax.experimental.pallas import tpu as pltpu


def _fm_kernel(x_ref, o_ref, *, field_size, emb_size, pack):
    """One batch tile.

    x_ref: (rows, pack*F*E) -- each row holds `pack` consecutive samples, each
           sample a flattened (field, emb) segment; batch rows on sublanes.
    o_ref: (1, rows*pack)   -- per-sample cross term, lane-dense in sample order.
    """
    F, E, k = field_size, emb_size, pack
    FE = F * E
    x = x_ref[...].astype(jnp.float32)           # f32 accumulation
    u = x * x
    rows = x.shape[0]

    cols = []
    for j in range(k):                           # static unroll over packed samples
        base = j * FE
        # sum over fields AND emb of x^2 (lane reduction over this segment)
        ssq = jnp.sum(u[:, base:base + FE], axis=1, keepdims=True)      # (rows, 1)
        # field sum, then its squared L2 norm over emb
        s = x[:, base:base + E]
        for f in range(1, F):
            s = s + x[:, base + f * E: base + (f + 1) * E]              # (rows, E)
        sos = jnp.sum(s * s, axis=1, keepdims=True)                     # (rows, 1)
        cols.append(0.5 * (sos - ssq))

    r = cols[0] if k == 1 else jnp.concatenate(cols, axis=1)            # (rows, k)
    # Row-major flatten == original sample order; one lane-dense store per tile.
    o_ref[...] = jnp.reshape(r, (1, rows * k)).astype(o_ref.dtype)


def _choose_pack(batch, field_size, emb_size, itemsize):
    """Pick k (power of two dividing batch) samples to pack per kernel row."""
    fe = field_size * emb_size
    for k in (64, 32, 16, 8, 4, 2):
        if batch % k != 0:
            continue
        if k * field_size > 256:            # bound static unroll in the kernel
            continue
        if k * fe * itemsize > 64 * 1024:   # keep a single row <= 64 KiB
            continue
        return k
    return 1


def _vmem_capacity_bytes():
    try:
        return int(pltpu.get_tpu_info().vmem_capacity_bytes)
    except Exception:
        return 64 * 1024 * 1024             # v7x per-TensorCore (smallest current gen)


def _choose_rows_per_tile(rows_total, pack, row_bytes_in, row_bytes_f32,
                          row_align, vmem_cap):
    # Budget: double-buffered input tile + ~3 f32 tile-sized temporaries,
    # capped at ~60% of physical VMEM (128 MiB v5e/v6e, 64 MiB v7x).
    budget = int(vmem_cap * 0.6)
    per_row = 2 * row_bytes_in + 3 * row_bytes_f32
    rows = max(budget // max(per_row, 1), row_align)
    rows = max((rows // row_align) * row_align, row_align)
    # Guarantee >= 2 grid steps when the batch is big enough so the "parallel"
    # grid axis can be split across v7x's two TensorCores.
    if rows_total * pack >= 256:
        half = -(-rows_total // 2)
        half = -(-half // row_align) * row_align
        rows = min(rows, half)
    return min(rows, rows_total)


def fm_pallas(inputs, *, rows_per_tile=None):
    """FM pairwise-interaction cross term.  inputs: (B, F, E) -> (B, 1)."""
    B, F, E = inputs.shape
    FE = F * E
    itemsize = jnp.dtype(inputs.dtype).itemsize

    k = _choose_pack(B, F, E, itemsize)
    rows_total = B // k
    W = k * FE                                   # lanes per kernel row
    x2 = inputs.reshape(rows_total, W)           # free, contiguous reshape

    lanes_padded = -(-W // 128) * 128
    row_bytes_in = lanes_padded * itemsize
    row_bytes_f32 = lanes_padded * 4
    # Output-block lane width (rows*k) must be a multiple of 128 when tiling;
    # input sublane dim must be a multiple of 8.
    row_align = max(8, 128 // k)
    vmem_cap = _vmem_capacity_bytes()

    if rows_per_tile is None:
        rows_per_tile = _choose_rows_per_tile(
            rows_total, k, row_bytes_in, row_bytes_f32, row_align, vmem_cap)
    rows_per_tile = min(int(rows_per_tile), rows_total)
    if rows_per_tile < rows_total:
        assert rows_per_tile % row_align == 0, (rows_per_tile, row_align)

    grid = (pl.cdiv(rows_total, rows_per_tile),)
    out_lanes = rows_per_tile * k

    in_tile_bytes = rows_per_tile * row_bytes_in
    out_tile_bytes = (-(-out_lanes // 128) * 128) * 4
    vmem_est = (2 * in_tile_bytes + 2 * out_tile_bytes
                + 3 * rows_per_tile * row_bytes_f32 + (4 << 20))
    vmem_limit = int(min(vmem_cap * 0.9, max(vmem_est, 32 << 20)))

    cost = pl.CostEstimate(
        flops=4 * B * FE,
        transcendentals=0,
        bytes_accessed=B * FE * itemsize + B * 4,
    )

    out = pl.pallas_call(
        functools.partial(_fm_kernel, field_size=F, emb_size=E, pack=k),
        out_shape=jax.ShapeDtypeStruct((1, B), jnp.float32),
        grid_spec=pltpu.PrefetchScalarGridSpec(
            num_scalar_prefetch=0,
            grid=grid,
            in_specs=[pl.BlockSpec((rows_per_tile, W), lambda i: (i, 0))],
            out_specs=pl.BlockSpec((1, out_lanes), lambda i: (0, i)),
        ),
        compiler_params=pltpu.CompilerParams(
            dimension_semantics=("parallel",),
            vmem_limit_bytes=vmem_limit,
        ),
        cost_estimate=cost,
    )(x2)

    # f32 accumulation throughout; cast to the module dtype only at the end.
    return out.reshape(B, 1).astype(inputs.dtype)


def fm_reference(inputs):
    """Pure-JAX reference mirroring the PyTorch forward exactly."""
    square_of_sum = jnp.sum(inputs, axis=1, keepdims=True) ** 2
    sum_of_square = jnp.sum(inputs * inputs, axis=1, keepdims=True)
    cross_term = square_of_sum - sum_of_square
    return 0.5 * jnp.sum(cross_term, axis=2)


if __name__ == "__main__":
    # 1) Small, deterministic example matching the module: batch=2, field=4, emb=8.
    x = jax.random.normal(jax.random.PRNGKey(0), (2, 4, 8), dtype=jnp.float32)
    out = jax.block_until_ready(fm_pallas(x))
    ref = fm_reference(x)
    assert out.shape == (2, 1), out.shape
    assert jnp.allclose(out, ref, atol=1e-4, rtol=1e-4), (out, ref)

    # 2) Packed + tiled/pipelined path (grid of 2 steps).
    x2 = jax.random.normal(jax.random.PRNGKey(1), (512, 6, 16), dtype=jnp.float32)
    out2 = jax.block_until_ready(fm_pallas(x2, rows_per_tile=8))
    assert out2.shape == (512, 1)
    assert jnp.allclose(out2, fm_reference(x2), atol=1e-4, rtol=1e-4)

    # 3) Ragged last tile: B=300 with a forced small tile (3 grid steps, the last
    #    one partially out of bounds on both the input rows and output lanes).
    x3 = jax.random.normal(jax.random.PRNGKey(2), (300, 4, 8), dtype=jnp.float32)
    out3 = jax.block_until_ready(fm_pallas(x3, rows_per_tile=32))
    assert out3.shape == (300, 1)
    assert jnp.allclose(out3, fm_reference(x3), atol=1e-4, rtol=1e-4)

    # 4) Default (auto) tiling path, larger batch, exercises the >=2-step rule.
    x4 = jax.random.normal(jax.random.PRNGKey(3), (4096, 8, 8), dtype=jnp.float32)
    out4 = jax.block_until_ready(fm_pallas(x4))
    assert out4.shape == (4096, 1)
    assert jnp.allclose(out4, fm_reference(x4), atol=1e-4, rtol=1e-4)

    # 5) bf16 input: kernel accumulates in f32, only the final (B, 1) cast rounds.
    x5 = jax.random.normal(jax.random.PRNGKey(4), (256, 10, 4)).astype(jnp.bfloat16)
    out5 = jax.block_until_ready(fm_pallas(x5))
    ref5 = fm_reference(x5.astype(jnp.float32))
    assert out5.shape == (256, 1)
    assert jnp.allclose(out5.astype(jnp.float32), ref5, atol=0.25, rtol=0.05)

    print("KERNEL_OK")
</pallas_src>

<mosaic_0001>
module attributes {stable_mosaic.version = 11 : i64} {
  func.func @_fm_kernel(%arg0: i32, %arg1: memref<1x64xf32, #tpu.memory_space<vmem>>, %arg2: memref<1x2xf32, #tpu.memory_space<vmem>>) attributes {dimension_semantics = [#tpu.dimension_semantics<parallel>], iteration_bounds = array<i64: 1>, scalar_prefetch = 0 : i64, scratch_operands = 0 : i64, tpu.core_type = #tpu.core_type<tc>, window_params = [{transform_indices = @transform_0, window_bounds = array<i64: 1, 64>}, {transform_indices = @transform_1, window_bounds = array<i64: 1, 2>}]} {
    %c0 = arith.constant 0 : index
    %c0_0 = arith.constant 0 : index
    %0 = vector.load %arg1[%c0, %c0_0] : memref<1x64xf32, #tpu.memory_space<vmem>>, vector<1x64xf32>
    %1 = arith.mulf %0, %0 : vector<1x64xf32>
    %2 = vector.extract_strided_slice %1 {offsets = [0, 0], sizes = [1, 32], strides = [1, 1]} : vector<1x64xf32> to vector<1x32xf32>
    %cst = arith.constant dense<0.000000e+00> : vector<1xf32>
    %3 = vector.multi_reduction <add>, %2, %cst [1] : vector<1x32xf32> to vector<1xf32>
    %4 = vector.shape_cast %3 : vector<1xf32> to vector<1x1xf32>
    %5 = vector.extract_strided_slice %0 {offsets = [0, 0], sizes = [1, 8], strides = [1, 1]} : vector<1x64xf32> to vector<1x8xf32>
    %6 = vector.extract_strided_slice %0 {offsets = [0, 8], sizes = [1, 8], strides = [1, 1]} : vector<1x64xf32> to vector<1x8xf32>
    %7 = arith.addf %5, %6 : vector<1x8xf32>
    %8 = vector.extract_strided_slice %0 {offsets = [0, 16], sizes = [1, 8], strides = [1, 1]} : vector<1x64xf32> to vector<1x8xf32>
    %9 = arith.addf %7, %8 : vector<1x8xf32>
    %10 = vector.extract_strided_slice %0 {offsets = [0, 24], sizes = [1, 8], strides = [1, 1]} : vector<1x64xf32> to vector<1x8xf32>
    %11 = arith.addf %9, %10 : vector<1x8xf32>
    %12 = arith.mulf %11, %11 : vector<1x8xf32>
    %cst_1 = arith.constant dense<0.000000e+00> : vector<1xf32>
    %13 = vector.multi_reduction <add>, %12, %cst_1 [1] : vector<1x8xf32> to vector<1xf32>
    %14 = vector.shape_cast %13 : vector<1xf32> to vector<1x1xf32>
    %15 = arith.subf %14, %4 : vector<1x1xf32>
    %cst_2 = arith.constant 5.000000e-01 : f32
    %16 = vector.broadcast %cst_2 : f32 to vector<1x1xf32>
    %17 = arith.mulf %16, %15 : vector<1x1xf32>
    %18 = vector.extract_strided_slice %1 {offsets = [0, 32], sizes = [1, 32], strides = [1, 1]} : vector<1x64xf32> to vector<1x32xf32>
    %cst_3 = arith.constant dense<0.000000e+00> : vector<1xf32>
    %19 = vector.multi_reduction <add>, %18, %cst_3 [1] : vector<1x32xf32> to vector<1xf32>
    %20 = vector.shape_cast %19 : vector<1xf32> to vector<1x1xf32>
    %21 = vector.extract_strided_slice %0 {offsets = [0, 32], sizes = [1, 8], strides = [1, 1]} : vector<1x64xf32> to vector<1x8xf32>
    %22 = vector.extract_strided_slice %0 {offsets = [0, 40], sizes = [1, 8], strides = [1, 1]} : vector<1x64xf32> to vector<1x8xf32>
    %23 = arith.addf %21, %22 : vector<1x8xf32>
    %24 = vector.extract_strided_slice %0 {offsets = [0, 48], sizes = [1, 8], strides = [1, 1]} : vector<1x64xf32> to vector<1x8xf32>
    %25 = arith.addf %23, %24 : vector<1x8xf32>
    %26 = vector.extract_strided_slice %0 {offsets = [0, 56], sizes = [1, 8], strides = [1, 1]} : vector<1x64xf32> to vector<1x8xf32>
    %27 = arith.addf %25, %26 : vector<1x8xf32>
    %28 = arith.mulf %27, %27 : vector<1x8xf32>
    %cst_4 = arith.constant dense<0.000000e+00> : vector<1xf32>
    %29 = vector.multi_reduction <add>, %28, %cst_4 [1] : vector<1x8xf32> to vector<1xf32>
    %30 = vector.shape_cast %29 : vector<1xf32> to vector<1x1xf32>
    %31 = arith.subf %30, %20 : vector<1x1xf32>
    %cst_5 = arith.constant 5.000000e-01 : f32
    %32 = vector.broadcast %cst_5 : f32 to vector<1x1xf32>
    %33 = arith.mulf %32, %31 : vector<1x1xf32>
    %34 = tpu.concatenate %17, %33 in 1 : vector<1x1xf32>, vector<1x1xf32> -> vector<1x2xf32>
    %c0_6 = arith.constant 0 : index
    %c0_7 = arith.constant 0 : index
    %35 = vector.load %arg2[%c0_6, %c0_7] : memref<1x2xf32, #tpu.memory_space<vmem>>, vector<1x2xf32>
    tpu.vector_store %arg2[%c0_6, %c0_7], %34 {strides = array<i32>} : memref<1x2xf32, #tpu.memory_space<vmem>>, vector<1x2xf32>,
    return
  }
  func.func @transform_0(%arg0: i32) -> (i32, i32) {
    %c0_i32 = arith.constant 0 : i32
    %c0_i32_0 = arith.constant 0 : i32
    return %arg0, %c0_i32 : i32, i32
  }
  func.func @transform_1(%arg0: i32) -> (i32, i32) {
    %c0_i32 = arith.constant 0 : i32
    %c0_i32_0 = arith.constant 0 : i32
    return %c0_i32, %arg0 : i32, i32
  }
}

</mosaic_0001>

<llo_original>
// kernel: tpu_custom_call.1
$region0: #{tpu_custom_call.1}
  #allocation0 [shape = 'u32[]', space=smem, size = 0x4, offset = 0x4, fixed_abs, tag = 'smem constant byte address 0x4 - core index']
  #allocation1 [shape = 'u32[144,128]{1,0:T(1,128)}', space=vmem, size = 0x12000, scoped, tag = 'internal scratch']
  %s0 = inlined_call_operand.hbm [shape: f32[1,64], index: 0, kind: input, shape index: {}]
  %s1 = inlined_call_operand.hbm [shape: f32[1,2], index: 1, kind: output, shape index: {}]
  %s2 = sld [smem:[#allocation0]]
  $region18: #{tpu_custom_call.1} parent=0
    _
  %s4 = ssub.s32 1, %s2
  %s5 = scalar_select 0, %s4, %s2
  $region1: #{tpu_custom_call.1} parent=0
    #allocation2 [shape = 'u8[512]{0}', space=vmem, size = 0x400, scoped, tag = 'input window, operand 0, single buffered']
    #allocation3 [shape = 's32[1]{0}', space=sflag, size = 0x4, scoped, tag = 'scoped memory for tpu_custom_call.1']
    #allocation4 [shape = 's32[1]{0}', space=sflag, size = 0x4, scoped, tag = 'scoped memory for tpu_custom_call.1']
    #allocation5 [shape = 'u8[512]{0}', space=vmem, size = 0x400, scoped, tag = 'output window, operand 0, single buffered']
    %6 = vsyncpa [#allocation3], 0
    %7 = vsyncpa [#allocation4], 0
    // Predicated region
    $region2: #{tpu_custom_call.1} parent=1 // pred_check
      _
    $region3: #{tpu_custom_call.1} parent=1 // pred_check_branch
      %9 = sbr.rel (0) target = $region5
    $region4: #{tpu_custom_call.1} parent=1 // pred_region
      %s11 = ssub.s32 16, 16
      %12 = vsyncadd [#allocation3], %s11
      %s14 = sshll.u32 [#allocation2], 4
      %s15 = int_to_ptr.vmem [resolvable:$true] %s14
      %17 = dma.hbm_to_vmem [thread:$0]  %s0, 16, %s15, [#allocation3]
    $region5: #{tpu_custom_call.1} parent=1 // pred_fallthru
      _
    // Predicated region
    $region6: #{tpu_custom_call.1} parent=1 // pred_check
      _
    $region7: #{tpu_custom_call.1} parent=1 // pred_check_branch
      %19 = sbr.rel (0) target = $region9
    $region8: #{tpu_custom_call.1} parent=1 // pred_region
      %20 = dma.done [#allocation3], 16
    $region9: #{tpu_custom_call.1} parent=1 // pred_fallthru
      _
    %v21 = vld [vmem:[#allocation2] sm:$0x1]
    %v22 = vmul.f32 %v21, %v21
    %vm23 = vcmask 253952
    %v24 = vsel %vm23, %v22, 0.0
    %25 = vadd.xlane.f32.xlu0 %v24
    %v26 = vpop.xlane.xlu0 %25
    %28 = vrot.lane.b32.xlu0 %v21, 120
    %v29 = vpop.permute.xlu0 %28
    %v31 = vadd.f32 %v21, %v29
    %32 = vrot.lane.b32.xlu0 %v21, 112
    %v33 = vpop.permute.xlu0 %32
    %v35 = vadd.f32 %v31, %v33
    %36 = vrot.lane.b32.xlu0 %v21, 104
    %v37 = vpop.permute.xlu0 %36
    %v39 = vadd.f32 %v35, %v37
    %v40 = vmul.f32 %v39, %v39
    %vm41 = vcmask 57344
    %v42 = vsel %vm41, %v40, 0.0
    %43 = vadd.xlane.f32.xlu0 %v42
    %v44 = vpop.xlane.xlu0 %43
    %v45 = vsub.f32 %v44, %v26
    %v46 = vmul.f32 %v45, 0.5
    %v48 = vlaneseq
    %v49 = vshrl.u32 %v48, 7
    %v50 = vsub.s32 0, %v49
    %v51 = vrot.slane %v22, %v50
    %52 = vrot.lane.b32.xlu0 %v51, 96
    %v53 = vpop.permute.xlu0 %52
    %v55 = vsel %vm23, %v53, 0.0
    %56 = vadd.xlane.f32.xlu0 %v55
    %v57 = vpop.xlane.xlu0 %56
    %v59 = vlaneseq
    %v60 = vshrl.u32 %v59, 7
    %v61 = vsub.s32 0, %v60
    %v62 = vrot.slane %v40, %v61
    %63 = vrot.lane.b32.xlu0 %v62, 96
    %v64 = vpop.permute.xlu0 %63
    %v66 = vsel %vm41, %v64, 0.0
    %67 = vadd.xlane.f32.xlu0 %v66
    %v68 = vpop.xlane.xlu0 %67
    %v69 = vsub.f32 %v68, %v57
    %v70 = vmul.f32 %v69, 0.5
    %vm71 = vcmask 7168
    %v72 = vsel %vm71, %v46, %v70
    %vm73 = vcmask 8192
    %74 = vst.msk [vmem:[#allocation5] sm:$0x1] %vm73, %v72
    // Predicated region
    $region10: #{tpu_custom_call.1} parent=1 // pred_check
      _
    $region11: #{tpu_custom_call.1} parent=1 // pred_check_branch
      %76 = sbr.rel (0) target = $region13
    $region12: #{tpu_custom_call.1} parent=1 // pred_region
      %s78 = ssub.s32 16, 16
      %79 = vsyncadd [#allocation4], %s78
      %s81 = sshll.u32 [#allocation5], 4
      %s82 = int_to_ptr.vmem [resolvable:$true] %s81
      %84 = dma.vmem_to_hbm [thread:$0]  %s82, 16, %s1, [#allocation4]
    $region13: #{tpu_custom_call.1} parent=1 // pred_fallthru
      _
    // Predicated region
    $region14: #{tpu_custom_call.1} parent=1 // pred_check
      _
    $region15: #{tpu_custom_call.1} parent=1 // pred_check_branch
      %86 = sbr.rel (0) target = $region17
    $region16: #{tpu_custom_call.1} parent=1 // pred_region
      %87 = dma.done [#allocation4], 16
    $region17: #{tpu_custom_call.1} parent=1 // pred_fallthru
      _
    %88 = vsyncpa [#allocation3], 1
    %89 = vsyncpa [#allocation4], 1

</llo_original>
